<compile_context>
chip_gen: v5e
topology: v5e:2x2
jax: 0.10.0
libtpu: 0.0.40
codegen_flags: <defaults>
</compile_context>

<pallas_src>
import jax
import jax.numpy as jnp
from jax.experimental import pallas as pl
from jax.experimental.pallas import tpu as pltpu

NX = 8
NU = 2
HIDDEN = 256
OUT_PAD = 128           # lane-dense padded output width (multiple of 128, >= NX)
TILE_M = 2048           # batch rows per grid step
MIN_SPLIT_ROWS = 256    # only split into >=2 grid steps if each tile gets >= this many rows


def _round_up(n, m):
    return ((n + m - 1) // m) * m


def _cdiv(a, b):
    return (a + b - 1) // b


def _choose_tile(batch, tile_m):
    """Pick a batch-tile size: >=2 grid steps for large batches (v7x dual-TC),
    16-row alignment (bf16 output sublane packing), capped at tile_m."""
    b_aligned = _round_up(batch, 16)
    if b_aligned >= 2 * MIN_SPLIT_ROWS:
        tm = min(tile_m, _round_up(_cdiv(b_aligned, 2), 16))
    else:
        tm = min(tile_m, b_aligned)
    return tm


def _mlp_kernel(x_ref, u_ref,
                w1x_ref, w1u_ref, b1_ref,
                w2_ref, b2_ref,
                w3_ref, b3_ref,
                w4_ref, b4_ref,
                out_ref):
    # In-kernel bf16 cast of the f32 inputs (avoids separate XLA cast passes).
    x = x_ref[...].astype(jnp.bfloat16)
    u = u_ref[...].astype(jnp.bfloat16)

    # Layer 1: concat-free — x @ W1[:nx] + u @ W1[nx:], f32 accumulation on the MXU.
    h = (jnp.dot(x, w1x_ref[...], preferred_element_type=jnp.float32)
         + jnp.dot(u, w1u_ref[...], preferred_element_type=jnp.float32))
    h = jnp.maximum(h + b1_ref[...], 0.0).astype(jnp.bfloat16)

    # Layer 2: Linear(256, 256) + ReLU (bf16 operands, f32 accumulate, bf16 live value).
    h = jnp.dot(h, w2_ref[...], preferred_element_type=jnp.float32)
    h = jnp.maximum(h + b2_ref[...], 0.0).astype(jnp.bfloat16)

    # Layer 3: Linear(256, 256) + ReLU.
    h = jnp.dot(h, w3_ref[...], preferred_element_type=jnp.float32)
    h = jnp.maximum(h + b3_ref[...], 0.0).astype(jnp.bfloat16)

    # Layer 4: Linear(256, nx) zero-padded to 128 lanes; bf16 store (f32 accumulate kept).
    o = (jnp.dot(h, w4_ref[...], preferred_element_type=jnp.float32) + b4_ref[...])
    out_ref[...] = o.astype(out_ref.dtype)


def init_params(key, nx=NX, nu=NU, hidden=HIDDEN):
    """Deterministic init mimicking PyTorch nn.Linear (uniform +/- 1/sqrt(fan_in)).

    Weights are stored [in_features, out_features] (transposed vs nn.Linear.weight)."""
    dims = [(nu + nx, hidden), (hidden, hidden), (hidden, hidden), (hidden, nx)]
    params = {}
    for i, (fan_in, fan_out) in enumerate(dims, start=1):
        key, kw, kb = jax.random.split(key, 3)
        bound = 1.0 / jnp.sqrt(float(fan_in))
        params[f"w{i}"] = jax.random.uniform(
            kw, (fan_in, fan_out), jnp.float32, minval=-bound, maxval=bound)
        params[f"b{i}"] = jax.random.uniform(
            kb, (1, fan_out), jnp.float32, minval=-bound, maxval=bound)
    return params


def prepare_params(params, nx=NX):
    """Kernel-layout params: bf16 weights, split w1 into (x, u) halves, pad layer 4
    to OUT_PAD lanes. Biases stay f32 (bias-add / ReLU done in f32 in-kernel)."""
    w1 = params["w1"].astype(jnp.bfloat16)
    pad = OUT_PAD - params["w4"].shape[1]
    return {
        "w1x": w1[:nx],
        "w1u": w1[nx:],
        "b1": params["b1"].astype(jnp.float32),
        "w2": params["w2"].astype(jnp.bfloat16),
        "b2": params["b2"].astype(jnp.float32),
        "w3": params["w3"].astype(jnp.bfloat16),
        "b3": params["b3"].astype(jnp.float32),
        "w4": jnp.pad(params["w4"], ((0, 0), (0, pad))).astype(jnp.bfloat16),
        "b4": jnp.pad(params["b4"], ((0, 0), (0, pad))).astype(jnp.float32),
    }


def fwd_model(x, u, kparams, *, tile_m=TILE_M):
    """Equivalent of Fwd_model.forward(x, u): MLP over concat([x, u], -1). Returns f32."""
    batch = x.shape[0]
    tm = _choose_tile(batch, tile_m)
    batch_p = _round_up(batch, tm)

    # f32 inputs go straight in (bf16 cast happens in-kernel).
    x_p = jnp.pad(x.astype(jnp.float32), ((0, batch_p - batch), (0, 0)))
    u_p = jnp.pad(u.astype(jnp.float32), ((0, batch_p - batch), (0, 0)))

    row_map = lambda i: (i, 0)     # activation tiles stream with the grid
    const_map = lambda i: (0, 0)   # weights/biases stay VMEM-resident

    in_specs = [
        pl.BlockSpec((tm, NX), row_map),
        pl.BlockSpec((tm, NU), row_map),
        pl.BlockSpec((NX, HIDDEN), const_map),
        pl.BlockSpec((NU, HIDDEN), const_map),
        pl.BlockSpec((1, HIDDEN), const_map),
        pl.BlockSpec((HIDDEN, HIDDEN), const_map),
        pl.BlockSpec((1, HIDDEN), const_map),
        pl.BlockSpec((HIDDEN, HIDDEN), const_map),
        pl.BlockSpec((1, HIDDEN), const_map),
        pl.BlockSpec((HIDDEN, OUT_PAD), const_map),
        pl.BlockSpec((1, OUT_PAD), const_map),
    ]
    out_spec = pl.BlockSpec((tm, OUT_PAD), row_map)

    flops = 2 * batch_p * ((NX + NU) * HIDDEN + 2 * HIDDEN * HIDDEN + HIDDEN * OUT_PAD)
    weight_bytes = sum(int(v.size) * v.dtype.itemsize for v in kparams.values())
    bytes_accessed = ((int(x_p.size) + int(u_p.size)) * 4       # f32 inputs
                      + batch_p * OUT_PAD * 2                   # bf16 padded output
                      + weight_bytes)

    out = pl.pallas_call(
        _mlp_kernel,
        out_shape=jax.ShapeDtypeStruct((batch_p, OUT_PAD), jnp.bfloat16),
        grid=(batch_p // tm,),
        in_specs=in_specs,
        out_specs=out_spec,
        compiler_params=pltpu.CompilerParams(
            dimension_semantics=("parallel",)),
        cost_estimate=pl.CostEstimate(
            flops=flops, transcendentals=0, bytes_accessed=bytes_accessed),
    )(x_p, u_p,
      kparams["w1x"], kparams["w1u"], kparams["b1"],
      kparams["w2"], kparams["b2"],
      kparams["w3"], kparams["b3"],
      kparams["w4"], kparams["b4"])

    # TODO(synk): if the consumer can take the padded (batch, 128) bf16 layout
    # directly, drop this slice to save another HBM pass.
    return out[:batch, :NX].astype(jnp.float32)


def _ref(x, u, p):
    """Pure-JAX reference following the same numerics (bf16 operands, f32 accumulation)."""
    xu = jnp.concatenate([x, u], axis=-1).astype(jnp.bfloat16)
    w1 = jnp.concatenate([p["w1x"], p["w1u"]], axis=0)
    h = jnp.maximum(jnp.dot(xu, w1, preferred_element_type=jnp.float32) + p["b1"], 0.0)
    h = jnp.maximum(jnp.dot(h.astype(jnp.bfloat16), p["w2"],
                            preferred_element_type=jnp.float32) + p["b2"], 0.0)
    h = jnp.maximum(jnp.dot(h.astype(jnp.bfloat16), p["w3"],
                            preferred_element_type=jnp.float32) + p["b3"], 0.0)
    o = jnp.dot(h.astype(jnp.bfloat16), p["w4"],
                preferred_element_type=jnp.float32) + p["b4"]
    return o[:, :NX]


if __name__ == "__main__":
    key = jax.random.PRNGKey(0)
    kp, kx, ku = jax.random.split(key, 3)

    params = init_params(kp)
    kparams = prepare_params(params)

    # Small demo batch (latency-floor regime).
    batch = 8
    x = jax.random.normal(kx, (batch, NX), jnp.float32)
    u = jax.random.normal(ku, (batch, NU), jnp.float32)

    out = jax.block_until_ready(fwd_model(x, u, kparams))
    expected = _ref(x, u, kparams)
    assert out.shape == (batch, NX)
    assert jnp.allclose(out, expected, atol=2e-2, rtol=2e-2), \
        float(jnp.max(jnp.abs(out - expected)))

    # Larger batch exercising the multi-step grid (>=2 tiles) + row padding path.
    batch2 = 600
    x2 = jax.random.normal(kx, (batch2, NX), jnp.float32)
    u2 = jax.random.normal(ku, (batch2, NU), jnp.float32)
    out2 = jax.block_until_ready(fwd_model(x2, u2, kparams))
    expected2 = _ref(x2, u2, kparams)
    assert out2.shape == (batch2, NX)
    assert jnp.allclose(out2, expected2, atol=2e-2, rtol=2e-2), \
        float(jnp.max(jnp.abs(out2 - expected2)))

    print("KERNEL_OK")
</pallas_src>

<mosaic_0001>
module attributes {stable_mosaic.version = 11 : i64} {
  func.func @_mlp_kernel(%arg0: i32, %arg1: memref<16x8xf32, #tpu.memory_space<vmem>>, %arg2: memref<16x2xf32, #tpu.memory_space<vmem>>, %arg3: memref<8x256xbf16, #tpu.memory_space<vmem>>, %arg4: memref<2x256xbf16, #tpu.memory_space<vmem>>, %arg5: memref<1x256xf32, #tpu.memory_space<vmem>>, %arg6: memref<256x256xbf16, #tpu.memory_space<vmem>>, %arg7: memref<1x256xf32, #tpu.memory_space<vmem>>, %arg8: memref<256x256xbf16, #tpu.memory_space<vmem>>, %arg9: memref<1x256xf32, #tpu.memory_space<vmem>>, %arg10: memref<256x128xbf16, #tpu.memory_space<vmem>>, %arg11: memref<1x128xf32, #tpu.memory_space<vmem>>, %arg12: memref<16x128xbf16, #tpu.memory_space<vmem>>) attributes {dimension_semantics = [#tpu.dimension_semantics<parallel>], iteration_bounds = array<i64: 1>, scalar_prefetch = 0 : i64, scratch_operands = 0 : i64, tpu.core_type = #tpu.core_type<tc>, window_params = [{transform_indices = @transform_0, window_bounds = array<i64: 16, 8>}, {transform_indices = @transform_1, window_bounds = array<i64: 16, 2>}, {pipeline_mode = #tpu.pipeline_mode<synchronous>, transform_indices = @transform_2, window_bounds = array<i64: 8, 256>}, {pipeline_mode = #tpu.pipeline_mode<synchronous>, transform_indices = @transform_3, window_bounds = array<i64: 2, 256>}, {pipeline_mode = #tpu.pipeline_mode<synchronous>, transform_indices = @transform_4, window_bounds = array<i64: 1, 256>}, {pipeline_mode = #tpu.pipeline_mode<synchronous>, transform_indices = @transform_5, window_bounds = array<i64: 256, 256>}, {pipeline_mode = #tpu.pipeline_mode<synchronous>, transform_indices = @transform_6, window_bounds = array<i64: 1, 256>}, {pipeline_mode = #tpu.pipeline_mode<synchronous>, transform_indices = @transform_7, window_bounds = array<i64: 256, 256>}, {pipeline_mode = #tpu.pipeline_mode<synchronous>, transform_indices = @transform_8, window_bounds = array<i64: 1, 256>}, {pipeline_mode = #tpu.pipeline_mode<synchronous>, transform_indices = @transform_9, window_bounds = array<i64: 256, 128>}, {pipeline_mode = #tpu.pipeline_mode<synchronous>, transform_indices = @transform_10, window_bounds = array<i64: 1, 128>}, {transform_indices = @transform_11, window_bounds = array<i64: 16, 128>}]} {
    %c0 = arith.constant 0 : index
    %c0_0 = arith.constant 0 : index
    %0 = vector.load %arg1[%c0, %c0_0] : memref<16x8xf32, #tpu.memory_space<vmem>>, vector<16x8xf32>
    %1 = arith.truncf %0 : vector<16x8xf32> to vector<16x8xbf16>
    %c0_1 = arith.constant 0 : index
    %c0_2 = arith.constant 0 : index
    %2 = vector.load %arg2[%c0_1, %c0_2] : memref<16x2xf32, #tpu.memory_space<vmem>>, vector<16x2xf32>
    %3 = arith.truncf %2 : vector<16x2xf32> to vector<16x2xbf16>
    %c0_3 = arith.constant 0 : index
    %c0_4 = arith.constant 0 : index
    %4 = vector.load %arg3[%c0_3, %c0_4] : memref<8x256xbf16, #tpu.memory_space<vmem>>, vector<8x256xbf16>
    %cst = arith.constant dense<0.000000e+00> : vector<16x256xf32>
    %5 = tpu.matmul %1, %4, %cst {dimension_numbers = #tpu.dot_dimension_numbers<[1], [0], [0], [1], [0, 0, 1, 1], [], []>} : vector<16x8xbf16>, vector<8x256xbf16>, vector<16x256xf32> -> vector<16x256xf32>
    %c0_5 = arith.constant 0 : index
    %c0_6 = arith.constant 0 : index
    %6 = vector.load %arg4[%c0_5, %c0_6] : memref<2x256xbf16, #tpu.memory_space<vmem>>, vector<2x256xbf16>
    %cst_7 = arith.constant dense<0.000000e+00> : vector<16x256xf32>
    %7 = tpu.matmul %3, %6, %cst_7 {dimension_numbers = #tpu.dot_dimension_numbers<[1], [0], [0], [1], [0, 0, 1, 1], [], []>} : vector<16x2xbf16>, vector<2x256xbf16>, vector<16x256xf32> -> vector<16x256xf32>
    %8 = arith.addf %5, %7 : vector<16x256xf32>
    %c0_8 = arith.constant 0 : index
    %c0_9 = arith.constant 0 : index
    %9 = vector.load %arg5[%c0_8, %c0_9] : memref<1x256xf32, #tpu.memory_space<vmem>>, vector<1x256xf32>
    %10 = vector.broadcast %9 : vector<1x256xf32> to vector<16x256xf32>
    %11 = arith.addf %8, %10 : vector<16x256xf32>
    %cst_10 = arith.constant 0.000000e+00 : f32
    %12 = vector.broadcast %cst_10 : f32 to vector<16x256xf32>
    %13 = arith.maximumf %11, %12 : vector<16x256xf32>
    %14 = arith.truncf %13 : vector<16x256xf32> to vector<16x256xbf16>
    %c0_11 = arith.constant 0 : index
    %c0_12 = arith.constant 0 : index
    %15 = vector.load %arg6[%c0_11, %c0_12] : memref<256x256xbf16, #tpu.memory_space<vmem>>, vector<256x256xbf16>
    %cst_13 = arith.constant dense<0.000000e+00> : vector<16x256xf32>
    %16 = tpu.matmul %14, %15, %cst_13 {dimension_numbers = #tpu.dot_dimension_numbers<[1], [0], [0], [1], [0, 0, 1, 1], [], []>} : vector<16x256xbf16>, vector<256x256xbf16>, vector<16x256xf32> -> vector<16x256xf32>
    %c0_14 = arith.constant 0 : index
    %c0_15 = arith.constant 0 : index
    %17 = vector.load %arg7[%c0_14, %c0_15] : memref<1x256xf32, #tpu.memory_space<vmem>>, vector<1x256xf32>
    %18 = vector.broadcast %17 : vector<1x256xf32> to vector<16x256xf32>
    %19 = arith.addf %16, %18 : vector<16x256xf32>
    %cst_16 = arith.constant 0.000000e+00 : f32
    %20 = vector.broadcast %cst_16 : f32 to vector<16x256xf32>
    %21 = arith.maximumf %19, %20 : vector<16x256xf32>
    %22 = arith.truncf %21 : vector<16x256xf32> to vector<16x256xbf16>
    %c0_17 = arith.constant 0 : index
    %c0_18 = arith.constant 0 : index
    %23 = vector.load %arg8[%c0_17, %c0_18] : memref<256x256xbf16, #tpu.memory_space<vmem>>, vector<256x256xbf16>
    %cst_19 = arith.constant dense<0.000000e+00> : vector<16x256xf32>
    %24 = tpu.matmul %22, %23, %cst_19 {dimension_numbers = #tpu.dot_dimension_numbers<[1], [0], [0], [1], [0, 0, 1, 1], [], []>} : vector<16x256xbf16>, vector<256x256xbf16>, vector<16x256xf32> -> vector<16x256xf32>
    %c0_20 = arith.constant 0 : index
    %c0_21 = arith.constant 0 : index
    %25 = vector.load %arg9[%c0_20, %c0_21] : memref<1x256xf32, #tpu.memory_space<vmem>>, vector<1x256xf32>
    %26 = vector.broadcast %25 : vector<1x256xf32> to vector<16x256xf32>
    %27 = arith.addf %24, %26 : vector<16x256xf32>
    %cst_22 = arith.constant 0.000000e+00 : f32
    %28 = vector.broadcast %cst_22 : f32 to vector<16x256xf32>
    %29 = arith.maximumf %27, %28 : vector<16x256xf32>
    %30 = arith.truncf %29 : vector<16x256xf32> to vector<16x256xbf16>
    %c0_23 = arith.constant 0 : index
    %c0_24 = arith.constant 0 : index
    %31 = vector.load %arg10[%c0_23, %c0_24] : memref<256x128xbf16, #tpu.memory_space<vmem>>, vector<256x128xbf16>
    %cst_25 = arith.constant dense<0.000000e+00> : vector<16x128xf32>
    %32 = tpu.matmul %30, %31, %cst_25 {dimension_numbers = #tpu.dot_dimension_numbers<[1], [0], [0], [1], [0, 0, 1, 1], [], []>} : vector<16x256xbf16>, vector<256x128xbf16>, vector<16x128xf32> -> vector<16x128xf32>
    %c0_26 = arith.constant 0 : index
    %c0_27 = arith.constant 0 : index
    %33 = vector.load %arg11[%c0_26, %c0_27] : memref<1x128xf32, #tpu.memory_space<vmem>>, vector<1x128xf32>
    %34 = vector.broadcast %33 : vector<1x128xf32> to vector<16x128xf32>
    %35 = arith.addf %32, %34 : vector<16x128xf32>
    %36 = arith.truncf %35 : vector<16x128xf32> to vector<16x128xbf16>
    %c0_28 = arith.constant 0 : index
    %c0_29 = arith.constant 0 : index
    %37 = vector.load %arg12[%c0_28, %c0_29] : memref<16x128xbf16, #tpu.memory_space<vmem>>, vector<16x128xbf16>
    tpu.vector_store %arg12[%c0_28, %c0_29], %36 {strides = array<i32>} : memref<16x128xbf16, #tpu.memory_space<vmem>>, vector<16x128xbf16>,
    return
  }
  func.func @transform_0(%arg0: i32) -> (i32, i32) {
    %c0_i32 = arith.constant 0 : i32
    %c0_i32_0 = arith.constant 0 : i32
    return %arg0, %c0_i32 : i32, i32
  }
  func.func @transform_1(%arg0: i32) -> (i32, i32) {
    %c0_i32 = arith.constant 0 : i32
    %c0_i32_0 = arith.constant 0 : i32
    return %arg0, %c0_i32 : i32, i32
  }
  func.func @transform_2(%arg0: i32) -> (i32, i32) {
    %c0_i32 = arith.constant 0 : i32
    %c0_i32_0 = arith.constant 0 : i32
    %c0_i32_1 = arith.constant 0 : i32
    return %c0_i32, %c0_i32_0 : i32, i32
  }
  func.func @transform_3(%arg0: i32) -> (i32, i32) {
    %c0_i32 = arith.constant 0 : i32
    %c0_i32_0 = arith.constant 0 : i32
    %c0_i32_1 = arith.constant 0 : i32
    return %c0_i32, %c0_i32_0 : i32, i32
  }
  func.func @transform_4(%arg0: i32) -> (i32, i32) {
    %c0_i32 = arith.constant 0 : i32
    %c0_i32_0 = arith.constant 0 : i32
    %c0_i32_1 = arith.constant 0 : i32
    return %c0_i32, %c0_i32_0 : i32, i32
  }
  func.func @transform_5(%arg0: i32) -> (i32, i32) {
    %c0_i32 = arith.constant 0 : i32
    %c0_i32_0 = arith.constant 0 : i32
    %c0_i32_1 = arith.constant 0 : i32
    return %c0_i32, %c0_i32_0 : i32, i32
  }
  func.func @transform_6(%arg0: i32) -> (i32, i32) {
    %c0_i32 = arith.constant 0 : i32
    %c0_i32_0 = arith.constant 0 : i32
    %c0_i32_1 = arith.constant 0 : i32
    return %c0_i32, %c0_i32_0 : i32, i32
  }
  func.func @transform_7(%arg0: i32) -> (i32, i32) {
    %c0_i32 = arith.constant 0 : i32
    %c0_i32_0 = arith.constant 0 : i32
    %c0_i32_1 = arith.constant 0 : i32
    return %c0_i32, %c0_i32_0 : i32, i32
  }
  func.func @transform_8(%arg0: i32) -> (i32, i32) {
    %c0_i32 = arith.constant 0 : i32
    %c0_i32_0 = arith.constant 0 : i32
    %c0_i32_1 = arith.constant 0 : i32
    return %c0_i32, %c0_i32_0 : i32, i32
  }
  func.func @transform_9(%arg0: i32) -> (i32, i32) {
    %c0_i32 = arith.constant 0 : i32
    %c0_i32_0 = arith.constant 0 : i32
    %c0_i32_1 = arith.constant 0 : i32
    return %c0_i32, %c0_i32_0 : i32, i32
  }
  func.func @transform_10(%arg0: i32) -> (i32, i32) {
    %c0_i32 = arith.constant 0 : i32
    %c0_i32_0 = arith.constant 0 : i32
    %c0_i32_1 = arith.constant 0 : i32
    return %c0_i32, %c0_i32_0 : i32, i32
  }
  func.func @transform_11(%arg0: i32) -> (i32, i32) {
    %c0_i32 = arith.constant 0 : i32
    %c0_i32_0 = arith.constant 0 : i32
    return %arg0, %c0_i32 : i32, i32
  }
}

</mosaic_0001>

<llo_original>
// kernel: tpu_custom_call.1
$region0: #{tpu_custom_call.1}
  #allocation0 [shape = 'u32[]', space=smem, size = 0x4, offset = 0x4, fixed_abs, tag = 'smem constant byte address 0x4 - core index']
  #allocation1 [shape = 'u32[72,128]{1,0:T(1,128)}', space=vmem, size = 0x9000, scoped, tag = 'internal scratch']
  %s0 = inlined_call_operand.vmem [shape: f32[16,8], index: 0, kind: input, shape index: {}]
  %s1 = inlined_call_operand.vmem [shape: f32[16,2], index: 1, kind: input, shape index: {}]
  %s2 = inlined_call_operand.vmem [shape: bf16[8,256], index: 2, kind: input, shape index: {}]
  %s3 = inlined_call_operand.vmem [shape: bf16[2,256], index: 3, kind: input, shape index: {}]
  %s4 = inlined_call_operand.vmem [shape: f32[1,256], index: 4, kind: input, shape index: {}]
  %s5 = inlined_call_operand.hbm [shape: bf16[256,256], index: 5, kind: input, shape index: {}]
  %s6 = inlined_call_operand.vmem [shape: f32[1,256], index: 6, kind: input, shape index: {}]
  %s7 = inlined_call_operand.hbm [shape: bf16[256,256], index: 7, kind: input, shape index: {}]
  %s8 = inlined_call_operand.vmem [shape: f32[1,256], index: 8, kind: input, shape index: {}]
  %s9 = inlined_call_operand.hbm [shape: bf16[256,128], index: 9, kind: input, shape index: {}]
  %s10 = inlined_call_operand.vmem [shape: f32[1,128], index: 10, kind: input, shape index: {}]
  %s11 = inlined_call_operand.hbm [shape: bf16[16,128], index: 11, kind: output, shape index: {}]
  %s12 = sld [smem:[#allocation0]]
  $region66: #{tpu_custom_call.1} parent=0
    _
  %s14 = ssub.s32 1, %s12
  %s15 = scalar_select 0, %s14, %s12
  $region1: #{tpu_custom_call.1} parent=0
    #allocation2 [shape = 'u8[131072]{0}', space=vmem, size = 0x20000, scoped, tag = 'input window, operand 5, single buffered']
    #allocation3 [shape = 's32[1]{0}', space=sflag, size = 0x4, scoped, tag = 'scoped memory for tpu_custom_call.1']
    #allocation4 [shape = 's32[1]{0}', space=sflag, size = 0x4, scoped, tag = 'scoped memory for tpu_custom_call.1']
    #allocation5 [shape = 'u8[131072]{0}', space=vmem, size = 0x20000, scoped, tag = 'input window, operand 7, single buffered']
    #allocation6 [shape = 's32[1]{0}', space=sflag, size = 0x4, scoped, tag = 'scoped memory for tpu_custom_call.1']
    #allocation7 [shape = 'u8[65536]{0}', space=vmem, size = 0x10000, scoped, tag = 'input window, operand 9, single buffered']
    #allocation8 [shape = 'u8[4096]{0}', space=vmem, size = 0x1000, scoped, tag = 'output window, operand 0, single buffered']
    %16 = vsyncpa [#allocation3], 0
    %17 = vsyncpa [#allocation6], 0
    %18 = vsyncpa [#allocation4], 0
    // Predicated region
    $region2: #{tpu_custom_call.1} parent=1 // pred_check
      _
    $region3: #{tpu_custom_call.1} parent=1 // pred_check_branch
      %20 = sbr.rel (0) target = $region5
    $region4: #{tpu_custom_call.1} parent=1 // pred_region
      _
    $region5: #{tpu_custom_call.1} parent=1 // pred_fallthru
      _
    // Predicated region
    $region6: #{tpu_custom_call.1} parent=1 // pred_check
      _
    $region7: #{tpu_custom_call.1} parent=1 // pred_check_branch
      %22 = sbr.rel (0) target = $region9
    $region8: #{tpu_custom_call.1} parent=1 // pred_region
      _
    $region9: #{tpu_custom_call.1} parent=1 // pred_fallthru
      _
    // Predicated region
    $region10: #{tpu_custom_call.1} parent=1 // pred_check
      _
    $region11: #{tpu_custom_call.1} parent=1 // pred_check_branch
      %24 = sbr.rel (0) target = $region13
    $region12: #{tpu_custom_call.1} parent=1 // pred_region
      _
    $region13: #{tpu_custom_call.1} parent=1 // pred_fallthru
      _
    // Predicated region
    $region14: #{tpu_custom_call.1} parent=1 // pred_check
      _
    $region15: #{tpu_custom_call.1} parent=1 // pred_check_branch
      %26 = sbr.rel (0) target = $region17
    $region16: #{tpu_custom_call.1} parent=1 // pred_region
      _
    $region17: #{tpu_custom_call.1} parent=1 // pred_fallthru
      _
    // Predicated region
    $region18: #{tpu_custom_call.1} parent=1 // pred_check
      _
    $region19: #{tpu_custom_call.1} parent=1 // pred_check_branch
      %28 = sbr.rel (0) target = $region21
    $region20: #{tpu_custom_call.1} parent=1 // pred_region
      _
    $region21: #{tpu_custom_call.1} parent=1 // pred_fallthru
      _
    // Predicated region
    $region22: #{tpu_custom_call.1} parent=1 // pred_check
      _
    $region23: #{tpu_custom_call.1} parent=1 // pred_check_branch
      %30 = sbr.rel (0) target = $region25
    $region24: #{tpu_custom_call.1} parent=1 // pred_region
      %32 = vsyncadd [#allocation3], 0
      %s33 = sshll.u32 %s5, 4
      %s34 = int_to_ptr.hbm [resolvable:$true] %s33
      %s35 = sshll.u32 [#allocation2], 4
      %s36 = int_to_ptr.vmem [resolvable:$true] %s35
      %41 = dma.hbm_to_vmem [thread:$0]  %s34, 4096, %s36, [#allocation3], 128, 128, 8
    $region25: #{tpu_custom_call.1} parent=1 // pred_fallthru
      _
    // Predicated region
    $region26: #{tpu_custom_call.1} parent=1 // pred_check
      _
    $region27: #{tpu_custom_call.1} parent=1 // pred_check_branch
      %43 = sbr.rel (0) target = $region29
    $region28: #{tpu_custom_call.1} parent=1 // pred_region
      _
    $region29: #{tpu_custom_call.1} parent=1 // pred_fallthru
      _
    // Predicated region
    $region30: #{tpu_custom_call.1} parent=1 // pred_check
      _
    $region31: #{tpu_custom_call.1} parent=1 // pred_check_branch
      %45 = sbr.rel (0) target = $region33
    $region32: #{tpu_custom_call.1} parent=1 // pred_region
      %47 = vsyncadd [#allocation6], 0
      %s48 = sshll.u32 %s7, 4
      %s49 = int_to_ptr.hbm [resolvable:$true] %s48
      %s50 = sshll.u32 [#allocation5], 4
      %s51 = int_to_ptr.vmem [resolvable:$true] %s50
      %56 = dma.hbm_to_vmem [thread:$0]  %s49, 4096, %s51, [#allocation6], 128, 128, 8
    $region33: #{tpu_custom_call.1} parent=1 // pred_fallthru
      _
    // Predicated region
    $region34: #{tpu_custom_call.1} parent=1 // pred_check
      _
    $region35: #{tpu_custom_call.1} parent=1 // pred_check_branch
      %58 = sbr.rel (0) target = $region37
    $region36: #{tpu_custom_call.1} parent=1 // pred_region
      _
    $region37: #{tpu_custom_call.1} parent=1 // pred_fallthru
      _
    // Predicated region
    $region38: #{tpu_custom_call.1} parent=1 // pred_check
      _
    $region39: #{tpu_custom_call.1} parent=1 // pred_check_branch
      %60 = sbr.rel (0) target = $region41
    $region40: #{tpu_custom_call.1} parent=1 // pred_region
      %62 = vsyncadd [#allocation6], 0
      %s63 = sshll.u32 %s9, 4
      %s64 = int_to_ptr.hbm [resolvable:$true] %s63
      %s65 = sshll.u32 [#allocation7], 4
      %s66 = int_to_ptr.vmem [resolvable:$true] %s65
      %71 = dma.hbm_to_vmem [thread:$0]  %s64, 2048, %s66, [#allocation6], 64, 64, 4
    $region41: #{tpu_custom_call.1} parent=1 // pred_fallthru
      _
    // Predicated region
    $region42: #{tpu_custom_call.1} parent=1 // pred_check
      _
    $region43: #{tpu_custom_call.1} parent=1 // pred_check_branch
      %73 = sbr.rel (0) target = $region45
    $region44: #{tpu_custom_call.1} parent=1 // pred_region
      _
    $region45: #{tpu_custom_call.1} parent=1 // pred_fallthru
      _
    // Predicated region
    $region46: #{tpu_custom_call.1} parent=1 // pred_check
      _
    $region47: #{tpu_custom_call.1} parent=1 // pred_check_branch
      %75 = sbr.rel (0) target = $region49
    $region48: #{tpu_custom_call.1} parent=1 // pred_region
      %77 = dma.done [#allocation3], 4096
    $region49: #{tpu_custom_call.1} parent=1 // pred_fallthru
      _
    // Predicated region
    $region50: #{tpu_custom_call.1} parent=1 // pred_check
      _
    $region51: #{tpu_custom_call.1} parent=1 // pred_check_branch
      %79 = sbr.rel (0) target = $region53
    $region52: #{tpu_custom_call.1} parent=1 // pred_region
      %81 = dma.done [#allocation6], 4096
    $region53: #{tpu_custom_call.1} parent=1 // pred_fallthru
      _
    // Predicated region
    $region54: #{tpu_custom_call.1} parent=1 // pred_check
      _
    $region55: #{tpu_custom_call.1} parent=1 // pred_check_branch
      %83 = sbr.rel (0) target = $region57
    $region56: #{tpu_custom_call.1} parent=1 // pred_region
      %85 = dma.done [#allocation6], 2048
    $region57: #{tpu_custom_call.1} parent=1 // pred_fallthru
      _
    %v87 = vld [vmem:[%s0] sm:$0xff]
    %v88 = vld [vmem:[%s0 + $0x8] sm:$0xff]
    %v89 = vpack.c.bf16 %v88, %v87
    %v90 = vld [vmem:[%s1] sm:$0xff]
    %v91 = vld [vmem:[%s1 + $0x8] sm:$0xff]
    %v92 = vpack.c.bf16 %v91, %v90
    %v93 = vld [vmem:[%s2] sm:$0xff]
    %v94 = vld [vmem:[%s3] sm:$0x3]
    %96 = vst [vmem:[#allocation1] ss:$9 sm:$0xff] %v94
    %v97 = vld [vmem:[#allocation1] sm:$0xff]
    %v98 = vld [vmem:[#allocation1 + $0x9] sm:$0xff]
    %vm99 = vcmask 15360
    %v101 = vsel %vm99, %v92, 0
    %vm103 = vcmask 1040384
    %v104 = vsel %vm103, %v97, 0
    %v106 = vsel %vm103, %v98, 0
    %108 = vmatpush.bf16.msra.mxu0 0
    %109 = vmatpush.bf16.msra.mxu0 0
    %110 = vmatpush.bf16.msra.mxu0 0
    %111 = vmatpush.bf16.msra.mxu0 0
    %112 = vmatpush.bf16.msra.mxu0 0
    %113 = vmatpush.bf16.msra.mxu0 0
    %114 = vmatpush.bf16.msra.mxu0 0
    %115 = vmatpush.bf16.msra.mxu0 %v104
    %116 = vmatmul.bf16.gmra.mxu0 %v101
    %v117 = vpop.f32.mrf.mxu0
    %v118 = vadd.f32 0.0, %v117
    %v119 = vpop.f32.mrf.mxu0
    %v120 = vadd.f32 0.0, %v119
    %121 = vdwg.mxu0
    %122 = vmatpush.bf16.msra.mxu0 0
    %123 = vmatpush.bf16.msra.mxu0 0
    %124 = vmatpush.bf16.msra.mxu0 0
    %125 = vmatpush.bf16.msra.mxu0 0
    %126 = vmatpush.bf16.msra.mxu0 0
    %127 = vmatpush.bf16.msra.mxu0 0
    %128 = vmatpush.bf16.msra.mxu0 0
    %129 = vmatpush.bf16.msra.mxu0 %v106
    %130 = vmatmul.bf16.gmra.mxu0 %v101
    %v131 = vpop.f32.mrf.mxu0
    %v132 = vadd.f32 0.0, %v131
    %v133 = vpop.f32.mrf.mxu0
    %v134 = vadd.f32 0.0, %v133
    %135 = vdwg.mxu0
    %v137 = vunpack.c.l.b16 %v93
    %v138 = vunpack.c.h.b16 %v93
    %v139 = vpack.c.b16 %v137, %v137
    %v140 = vpack.c.b16 %v138, %v138
    %vm141 = vcmask 64512
    %v143 = vsel %vm141, %v89, 0
    %vm145 = vcmask 1043456
    %v147 = vsel %vm145, %v139, 0
    %v150 = vsel %vm145, %v140, 0
    %152 = vmatpush.bf16.msra.mxu0 0
    %153 = vmatpush.bf16.msra.mxu0 0
    %154 = vmatpush.bf16.msra.mxu0 0
    %155 = vmatpush.bf16.msra.mxu0 0
    %156 = vmatpush.bf16.msra.mxu0 0
    %157 = vmatpush.bf16.msra.mxu0 0
    %158 = vmatpush.bf16.msra.mxu0 0
    %159 = vmatpush.bf16.msra.mxu0 %v147
    %160 = vmatmul.bf16.gmra.mxu0 %v143
    %v161 = vpop.f32.mrf.mxu0
    %v162 = vadd.f32 %v118, %v161
    %v163 = vpop.f32.mrf.mxu0
    %v164 = vadd.f32 %v120, %v163
    %165 = vdwg.mxu0
    %166 = vmatpush.bf16.msra.mxu0 0
    %167 = vmatpush.bf16.msra.mxu0 0
    %168 = vmatpush.bf16.msra.mxu0 0
    %169 = vmatpush.bf16.msra.mxu0 0
    %170 = vmatpush.bf16.msra.mxu0 0
    %171 = vmatpush.bf16.msra.mxu0 0
    %172 = vmatpush.bf16.msra.mxu0 0
    %173 = vmatpush.bf16.msra.mxu0 %v150
    %174 = vmatmul.bf16.gmra.mxu0 %v143
    %v175 = vpop.f32.mrf.mxu0
    %v176 = vadd.f32 %v132, %v175
    %v177 = vpop.f32.mrf.mxu0
    %v178 = vadd.f32 %v134, %v177
    %179 = vdwg.mxu0
    %v180 = vld [vmem:[%s4] sm:$0x3]
    %v182 = vperm.slane %v180, 0
    %v183 = vperm.slane %v180, 1
    %v186 = vadd.f32 %v162, %v182
    %v187 = vadd.f32 %v176, %v183
    %v188 = vadd.f32 %v164, %v182
    %v189 = vadd.f32 %v178, %v183
    %v190 = vmax.f32 %v186, 0.0
    %v191 = vmax.f32 %v187, 0.0
    %v192 = vmax.f32 %v188, 0.0
    %v193 = vmax.f32 %v189, 0.0
    %v194 = vpack.c.bf16 %v192, %v190
    %v195 = vpack.c.bf16 %v193, %v191
    %v196 = vld [vmem:[#allocation2] sm:$0xff]
    %v197 = vld [vmem:[#allocation2 + $0x8] sm:$0xff]
    %v198 = vld [vmem:[#allocation2 + $0x10] sm:$0xff]
    %v199 = vld [vmem:[#allocation2 + $0x18] sm:$0xff]
    %v200 = vld [vmem:[#allocation2 + $0x20] sm:$0xff]
    %v201 = vld [vmem:[#allocation2 + $0x28] sm:$0xff]
    %v202 = vld [vmem:[#allocation2 + $0x30] sm:$0xff]
    %v203 = vld [vmem:[#allocation2 + $0x38] sm:$0xff]
    %v204 = vld [vmem:[#allocation2 + $0x40] sm:$0xff]
    %v205 = vld [vmem:[#allocation2 + $0x48] sm:$0xff]
    %v206 = vld [vmem:[#allocation2 + $0x50] sm:$0xff]
    %v207 = vld [vmem:[#allocation2 + $0x58] sm:$0xff]
    %v208 = vld [vmem:[#allocation2 + $0x60] sm:$0xff]
    %v209 = vld [vmem:[#allocation2 + $0x68] sm:$0xff]
    %v210 = vld [vmem:[#allocation2 + $0x70] sm:$0xff]
    %v211 = vld [vmem:[#allocation2 + $0x78] sm:$0xff]
    %v212 = vld [vmem:[#allocation2 + $0x80] sm:$0xff]
    %v213 = vld [vmem:[#allocation2 + $0x88] sm:$0xff]
    %v214 = vld [vmem:[#allocation2 + $0x90] sm:$0xff]
    %v215 = vld [vmem:[#allocation2 + $0x98] sm:$0xff]
    %v216 = vld [vmem:[#allocation2 + $0xa0] sm:$0xff]
    %v217 = vld [vmem:[#allocation2 + $0xa8] sm:$0xff]
    %v218 = vld [vmem:[#allocation2 + $0xb0] sm:$0xff]
    %v219 = vld [vmem:[#allocation2 + $0xb8] sm:$0xff]
    %v220 = vld [vmem:[#allocation2 + $0xc0] sm:$0xff]
    %v221 = vld [vmem:[#allocation2 + $0xc8] sm:$0xff]
    %v222 = vld [vmem:[#allocation2 + $0xd0] sm:$0xff]
    %v223 = vld [vmem:[#allocation2 + $0xd8] sm:$0xff]
    %v224 = vld [vmem:[#allocation2 + $0xe0] sm:$0xff]
    %v225 = vld [vmem:[#allocation2 + $0xe8] sm:$0xff]
    %v226 = vld [vmem:[#allocation2 + $0xf0] sm:$0xff]
    %v227 = vld [vmem:[#allocation2 + $0xf8] sm:$0xff]
    %v228 = vld [vmem:[%s6] sm:$0x3]
    %v230 = vperm.slane %v228, 0
    %v231 = vperm.slane %v228, 1
    %v266 = vunpack.c.l.b16 %v196
    %v267 = vunpack.c.h.b16 %v196
    %v268 = vunpack.c.l.b16 %v197
    %v269 = vunpack.c.h.b16 %v197
    %v270 = vunpack.c.l.b16 %v198
    %v271 = vunpack.c.h.b16 %v198
    %v272 = vunpack.c.l.b16 %v199
    %v273 = vunpack.c.h.b16 %v199
    %v274 = vunpack.c.l.b16 %v200
    %v275 = vunpack.c.h.b16 %v200
    %v276 = vunpack.c.l.b16 %v201
    %v277 = vunpack.c.h.b16 %v201
    %v278 = vunpack.c.l.b16 %v202
    %v279 = vunpack.c.h.b16 %v202
    %v280 = vunpack.c.l.b16 %v203
    %v281 = vunpack.c.h.b16 %v203
    %v282 = vunpack.c.l.b16 %v204
    %v283 = vunpack.c.h.b16 %v204
    %v284 = vunpack.c.l.b16 %v205
    %v285 = vunpack.c.h.b16 %v205
    %v286 = vunpack.c.l.b16 %v206
    %v287 = vunpack.c.h.b16 %v206
    %v288 = vunpack.c.l.b16 %v207
    %v289 = vunpack.c.h.b16 %v207
    %v290 = vunpack.c.l.b16 %v208
    %v291 = vunpack.c.h.b16 %v208
    %v292 = vunpack.c.l.b16 %v209
    %v293 = vunpack.c.h.b16 %v209
    %v294 = vunpack.c.l.b16 %v210
    %v295 = vunpack.c.h.b16 %v210
    %v296 = vunpack.c.l.b16 %v211
    %v297 = vunpack.c.h.b16 %v211
    %v298 = vunpack.c.l.b16 %v212
    %v299 = vunpack.c.h.b16 %v212
    %v300 = vunpack.c.l.b16 %v213
    %v301 = vunpack.c.h.b16 %v213
    %v302 = vunpack.c.l.b16 %v214
    %v303 = vunpack.c.h.b16 %v214
    %v304 = vunpack.c.l.b16 %v215
    %v305 = vunpack.c.h.b16 %v215
    %v306 = vunpack.c.l.b16 %v216
    %v307 = vunpack.c.h.b16 %v216
    %v308 = vunpack.c.l.b16 %v217
    %v309 = vunpack.c.h.b16 %v217
    %v310 = vunpack.c.l.b16 %v218
    %v311 = vunpack.c.h.b16 %v218
    %v312 = vunpack.c.l.b16 %v219
    %v313 = vunpack.c.h.b16 %v219
    %v314 = vunpack.c.l.b16 %v220
    %v315 = vunpack.c.h.b16 %v220
    %v316 = vunpack.c.l.b16 %v221
    %v317 = vunpack.c.h.b16 %v221
    %v318 = vunpack.c.l.b16 %v222
    %v319 = vunpack.c.h.b16 %v222
    %v320 = vunpack.c.l.b16 %v223
    %v321 = vunpack.c.h.b16 %v223
    %v322 = vunpack.c.l.b16 %v224
    %v323 = vunpack.c.h.b16 %v224
    %v324 = vunpack.c.l.b16 %v225
    %v325 = vunpack.c.h.b16 %v225
    %v326 = vunpack.c.l.b16 %v226
    %v327 = vunpack.c.h.b16 %v226
    %v328 = vunpack.c.l.b16 %v227
    %v329 = vunpack.c.h.b16 %v227
    %v330 = vpack.c.b16 %v268, %v266
    %v331 = vpack.c.b16 %v269, %v267
    %v332 = vpack.c.b16 %v272, %v270
    %v333 = vpack.c.b16 %v273, %v271
    %v334 = vpack.c.b16 %v276, %v274
    %v335 = vpack.c.b16 %v277, %v275
    %v336 = vpack.c.b16 %v280, %v278
    %v337 = vpack.c.b16 %v281, %v279
    %v338 = vpack.c.b16 %v284, %v282
    %v339 = vpack.c.b16 %v285, %v283
    %v340 = vpack.c.b16 %v288, %v286
    %v341 = vpack.c.b16 %v289, %v287
    %v342 = vpack.c.b16 %v292, %v290
    %v343 = vpack.c.b16 %v293, %v291
    %v344 = vpack.c.b16 %v296, %v294
    %v345 = vpack.c.b16 %v297, %v295
    %v346 = vpack.c.b16 %v300, %v298
    %v347 = vpack.c.b16 %v301, %v299
    %v348 = vpack.c.b16 %v304, %v302
    %v349 = vpack.c.b16 %v305, %v303
    %v350 = vpack.c.b16 %v308, %v306
    %v351 = vpack.c.b16 %v309, %v307
    %v352 = vpack.c.b16 %v312, %v310
    %v353 = vpack.c.b16 %v313, %v311
    %v354 = vpack.c.b16 %v316, %v314
    %v355 = vpack.c.b16 %v317, %v315
    %v356 = vpack.c.b16 %v320, %v318
    %v357 = vpack.c.b16 %v321, %v319
    %v358 = vpack.c.b16 %v324, %v322
    %v359 = vpack.c.b16 %v325, %v323
    %v360 = vpack.c.b16 %v328, %v326
    %v361 = vpack.c.b16 %v329, %v327
    %394 = vmatpush.bf16.msra.mxu0 %v344
    %395 = vmatpush.bf16.msra.mxu0 %v342
    %396 = vmatpush.bf16.msra.mxu0 %v340
    %397 = vmatpush.bf16.msra.mxu0 %v338
    %398 = vmatpush.bf16.msra.mxu0 %v336
    %399 = vmatpush.bf16.msra.mxu0 %v334
    %400 = vmatpush.bf16.msra.mxu0 %v332
    %401 = vmatpush.bf16.msra.mxu0 %v330
    %402 = vmatmul.bf16.gmra.mxu0 %v194
    %v403 = vpop.f32.mrf.mxu0
    %v404 = vadd.f32 %v230, %v403
    %v405 = vpop.f32.mrf.mxu0
    %v406 = vadd.f32 %v230, %v405
    %407 = vdwg.mxu0
    %408 = vmatpush.bf16.msra.mxu0 %v360
    %409 = vmatpush.bf16.msra.mxu0 %v358
    %410 = vmatpush.bf16.msra.mxu0 %v356
    %411 = vmatpush.bf16.msra.mxu0 %v354
    %412 = vmatpush.bf16.msra.mxu0 %v352
    %413 = vmatpush.bf16.msra.mxu0 %v350
    %414 = vmatpush.bf16.msra.mxu0 %v348
    %415 = vmatpush.bf16.msra.mxu0 %v346
    %416 = vmatmul.bf16.gmra.mxu0 %v195
    %v417 = vpop.f32.mrf.mxu0
    %v418 = vadd.f32 %v404, %v417
    %v419 = vpop.f32.mrf.mxu0
    %v420 = vadd.f32 %v406, %v419
    %421 = vdwg.mxu0
    %422 = vmatpush.bf16.msra.mxu0 %v345
    %423 = vmatpush.bf16.msra.mxu0 %v343
    %424 = vmatpush.bf16.msra.mxu0 %v341
    %425 = vmatpush.bf16.msra.mxu0 %v339
    %426 = vmatpush.bf16.msra.mxu0 %v337
    %427 = vmatpush.bf16.msra.mxu0 %v335
    %428 = vmatpush.bf16.msra.mxu0 %v333
    %429 = vmatpush.bf16.msra.mxu0 %v331
    %430 = vmatmul.bf16.gmra.mxu0 %v194
    %v431 = vpop.f32.mrf.mxu0
    %v432 = vadd.f32 %v231, %v431
    %v433 = vpop.f32.mrf.mxu0
    %v434 = vadd.f32 %v231, %v433
    %435 = vdwg.mxu0
    %436 = vmatpush.bf16.msra.mxu0 %v361
    %437 = vmatpush.bf16.msra.mxu0 %v359
    %438 = vmatpush.bf16.msra.mxu0 %v357
    %439 = vmatpush.bf16.msra.mxu0 %v355
    %440 = vmatpush.bf16.msra.mxu0 %v353
    %441 = vmatpush.bf16.msra.mxu0 %v351
    %442 = vmatpush.bf16.msra.mxu0 %v349
    %443 = vmatpush.bf16.msra.mxu0 %v347
    %444 = vmatmul.bf16.gmra.mxu0 %v195
    %v445 = vpop.f32.mrf.mxu0
    %v446 = vadd.f32 %v432, %v445
    %v447 = vpop.f32.mrf.mxu0
    %v448 = vadd.f32 %v434, %v447
    %449 = vdwg.mxu0
    %v450 = vmax.f32 %v418, 0.0
    %v451 = vmax.f32 %v446, 0.0
    %v452 = vmax.f32 %v420, 0.0
    %v453 = vmax.f32 %v448, 0.0
    %v454 = vpack.c.bf16 %v452, %v450
    %v455 = vpack.c.bf16 %v453, %v451
    %v456 = vld [vmem:[#allocation5] sm:$0xff]
    %v457 = vld [vmem:[#allocation5 + $0x8] sm:$0xff]
    %v458 = vld [vmem:[#allocation5 + $0x10] sm:$0xff]
    %v459 = vld [vmem:[#allocation5 + $0x18] sm:$0xff]
    %v460 = vld [vmem:[#allocation5 + $0x20] sm:$0xff]
    %v461 = vld [vmem:[#allocation5 + $0x28] sm:$0xff]
    %v462 = vld [vmem:[#allocation5 + $0x30] sm:$0xff]
    %v463 = vld [vmem:[#allocation5 + $0x38] sm:$0xff]
    %v464 = vld [vmem:[#allocation5 + $0x40] sm:$0xff]
    %v465 = vld [vmem:[#allocation5 + $0x48] sm:$0xff]
    %v466 = vld [vmem:[#allocation5 + $0x50] sm:$0xff]
    %v467 = vld [vmem:[#allocation5 + $0x58] sm:$0xff]
    %v468 = vld [vmem:[#allocation5 + $0x60] sm:$0xff]
    %v469 = vld [vmem:[#allocation5 + $0x68] sm:$0xff]
    %v470 = vld [vmem:[#allocation5 + $0x70] sm:$0xff]
    %v471 = vld [vmem:[#allocation5 + $0x78] sm:$0xff]
    %v472 = vld [vmem:[#allocation5 + $0x80] sm:$0xff]
    %v473 = vld [vmem:[#allocation5 + $0x88] sm:$0xff]
    %v474 = vld [vmem:[#allocation5 + $0x90] sm:$0xff]
    %v475 = vld [vmem:[#allocation5 + $0x98] sm:$0xff]
    %v476 = vld [vmem:[#allocation5 + $0xa0] sm:$0xff]
    %v477 = vld [vmem:[#allocation5 + $0xa8] sm:$0xff]
    %v478 = vld [vmem:[#allocation5 + $0xb0] sm:$0xff]
    %v479 = vld [vmem:[#allocation5 + $0xb8] sm:$0xff]
    %v480 = vld [vmem:[#allocation5 + $0xc0] sm:$0xff]
    %v481 = vld [vmem:[#allocation5 + $0xc8] sm:$0xff]
    %v482 = vld [vmem:[#allocation5 + $0xd0] sm:$0xff]
    %v483 = vld [vmem:[#allocation5 + $0xd8] sm:$0xff]
    %v484 = vld [vmem:[#allocation5 + $0xe0] sm:$0xff]
    %v485 = vld [vmem:[#allocation5 + $0xe8] sm:$0xff]
    %v486 = vld [vmem:[#allocation5 + $0xf0] sm:$0xff]
    %v487 = vld [vmem:[#allocation5 + $0xf8] sm:$0xff]
    %v488 = vld [vmem:[%s8] sm:$0x3]
    %v490 = vperm.slane %v488, 0
    %v491 = vperm.slane %v488, 1
    %v526 = vunpack.c.l.b16 %v456
    %v527 = vunpack.c.h.b16 %v456
    %v528 = vunpack.c.l.b16 %v457
    %v529 = vunpack.c.h.b16 %v457
    %v530 = vunpack.c.l.b16 %v458
    %v531 = vunpack.c.h.b16 %v458
    %v532 = vunpack.c.l.b16 %v459
    %v533 = vunpack.c.h.b16 %v459
    %v534 = vunpack.c.l.b16 %v460
    %v535 = vunpack.c.h.b16 %v460
    %v536 = vunpack.c.l.b16 %v461
    %v537 = vunpack.c.h.b16 %v461
    %v538 = vunpack.c.l.b16 %v462
    %v539 = vunpack.c.h.b16 %v462
    %v540 = vunpack.c.l.b16 %v463
    %v541 = vunpack.c.h.b16 %v463
    %v542 = vunpack.c.l.b16 %v464
    %v543 = vunpack.c.h.b16 %v464
    %v544 = vunpack.c.l.b16 %v465
    %v545 = vunpack.c.h.b16 %v465
    %v546 = vunpack.c.l.b16 %v466
    %v547 = vunpack.c.h.b16 %v466
    %v548 = vunpack.c.l.b16 %v467
    %v549 = vunpack.c.h.b16 %v467
    %v550 = vunpack.c.l.b16 %v468
    %v551 = vunpack.c.h.b16 %v468
    %v552 = vunpack.c.l.b16 %v469
    %v553 = vunpack.c.h.b16 %v469
    %v554 = vunpack.c.l.b16 %v470
    %v555 = vunpack.c.h.b16 %v470
    %v556 = vunpack.c.l.b16 %v471
    %v557 = vunpack.c.h.b16 %v471
    %v558 = vunpack.c.l.b16 %v472
    %v559 = vunpack.c.h.b16 %v472
    %v560 = vunpack.c.l.b16 %v473
    %v561 = vunpack.c.h.b16 %v473
    %v562 = vunpack.c.l.b16 %v474
    %v563 = vunpack.c.h.b16 %v474
    %v564 = vunpack.c.l.b16 %v475
    %v565 = vunpack.c.h.b16 %v475
    %v566 = vunpack.c.l.b16 %v476
    %v567 = vunpack.c.h.b16 %v476
    %v568 = vunpack.c.l.b16 %v477
    %v569 = vunpack.c.h.b16 %v477
    %v570 = vunpack.c.l.b16 %v478
    %v571 = vunpack.c.h.b16 %v478
    %v572 = vunpack.c.l.b16 %v479
    %v573 = vunpack.c.h.b16 %v479
    %v574 = vunpack.c.l.b16 %v480
    %v575 = vunpack.c.h.b16 %v480
    %v576 = vunpack.c.l.b16 %v481
    %v577 = vunpack.c.h.b16 %v481
    %v578 = vunpack.c.l.b16 %v482
    %v579 = vunpack.c.h.b16 %v482
    %v580 = vunpack.c.l.b16 %v483
    %v581 = vunpack.c.h.b16 %v483
    %v582 = vunpack.c.l.b16 %v484
    %v583 = vunpack.c.h.b16 %v484
    %v584 = vunpack.c.l.b16 %v485
    %v585 = vunpack.c.h.b16 %v485
    %v586 = vunpack.c.l.b16 %v486
    %v587 = vunpack.c.h.b16 %v486
    %v588 = vunpack.c.l.b16 %v487
    %v589 = vunpack.c.h.b16 %v487
    %v590 = vpack.c.b16 %v528, %v526
    %v591 = vpack.c.b16 %v529, %v527
    %v592 = vpack.c.b16 %v532, %v530
    %v593 = vpack.c.b16 %v533, %v531
    %v594 = vpack.c.b16 %v536, %v534
    %v595 = vpack.c.b16 %v537, %v535
    %v596 = vpack.c.b16 %v540, %v538
    %v597 = vpack.c.b16 %v541, %v539
    %v598 = vpack.c.b16 %v544, %v542
    %v599 = vpack.c.b16 %v545, %v543
    %v600 = vpack.c.b16 %v548, %v546
    %v601 = vpack.c.b16 %v549, %v547
    %v602 = vpack.c.b16 %v552, %v550
    %v603 = vpack.c.b16 %v553, %v551
    %v604 = vpack.c.b16 %v556, %v554
    %v605 = vpack.c.b16 %v557, %v555
    %v606 = vpack.c.b16 %v560, %v558
    %v607 = vpack.c.b16 %v561, %v559
    %v608 = vpack.c.b16 %v564, %v562
    %v609 = vpack.c.b16 %v565, %v563
    %v610 = vpack.c.b16 %v568, %v566
    %v611 = vpack.c.b16 %v569, %v567
    %v612 = vpack.c.b16 %v572, %v570
    %v613 = vpack.c.b16 %v573, %v571
    %v614 = vpack.c.b16 %v576, %v574
    %v615 = vpack.c.b16 %v577, %v575
    %v616 = vpack.c.b16 %v580, %v578
    %v617 = vpack.c.b16 %v581, %v579
    %v618 = vpack.c.b16 %v584, %v582
    %v619 = vpack.c.b16 %v585, %v583
    %v620 = vpack.c.b16 %v588, %v586
    %v621 = vpack.c.b16 %v589, %v587
    %654 = vmatpush.bf16.msra.mxu0 %v604
    %655 = vmatpush.bf16.msra.mxu0 %v602
    %656 = vmatpush.bf16.msra.mxu0 %v600
    %657 = vmatpush.bf16.msra.mxu0 %v598
    %658 = vmatpush.bf16.msra.mxu0 %v596
    %659 = vmatpush.bf16.msra.mxu0 %v594
    %660 = vmatpush.bf16.msra.mxu0 %v592
    %661 = vmatpush.bf16.msra.mxu0 %v590
    %662 = vmatmul.bf16.gmra.mxu0 %v454
    %v663 = vpop.f32.mrf.mxu0
    %v664 = vadd.f32 %v490, %v663
    %v665 = vpop.f32.mrf.mxu0
    %v666 = vadd.f32 %v490, %v665
    %667 = vdwg.mxu0
    %668 = vmatpush.bf16.msra.mxu0 %v620
    %669 = vmatpush.bf16.msra.mxu0 %v618
    %670 = vmatpush.bf16.msra.mxu0 %v616
    %671 = vmatpush.bf16.msra.mxu0 %v614
    %672 = vmatpush.bf16.msra.mxu0 %v612
    %673 = vmatpush.bf16.msra.mxu0 %v610
    %674 = vmatpush.bf16.msra.mxu0 %v608
    %675 = vmatpush.bf16.msra.mxu0 %v606
    %676 = vmatmul.bf16.gmra.mxu0 %v455
    %v677 = vpop.f32.mrf.mxu0
    %v678 = vadd.f32 %v664, %v677
    %v679 = vpop.f32.mrf.mxu0
    %v680 = vadd.f32 %v666, %v679
    %681 = vdwg.mxu0
    %682 = vmatpush.bf16.msra.mxu0 %v605
    %683 = vmatpush.bf16.msra.mxu0 %v603
    %684 = vmatpush.bf16.msra.mxu0 %v601
    %685 = vmatpush.bf16.msra.mxu0 %v599
    %686 = vmatpush.bf16.msra.mxu0 %v597
    %687 = vmatpush.bf16.msra.mxu0 %v595
    %688 = vmatpush.bf16.msra.mxu0 %v593
    %689 = vmatpush.bf16.msra.mxu0 %v591
    %690 = vmatmul.bf16.gmra.mxu0 %v454
    %v691 = vpop.f32.mrf.mxu0
    %v692 = vadd.f32 %v491, %v691
    %v693 = vpop.f32.mrf.mxu0
    %v694 = vadd.f32 %v491, %v693
    %695 = vdwg.mxu0
    %696 = vmatpush.bf16.msra.mxu0 %v621
    %697 = vmatpush.bf16.msra.mxu0 %v619
    %698 = vmatpush.bf16.msra.mxu0 %v617
    %699 = vmatpush.bf16.msra.mxu0 %v615
    %700 = vmatpush.bf16.msra.mxu0 %v613
    %701 = vmatpush.bf16.msra.mxu0 %v611
    %702 = vmatpush.bf16.msra.mxu0 %v609
    %703 = vmatpush.bf16.msra.mxu0 %v607
    %704 = vmatmul.bf16.gmra.mxu0 %v455
    %v705 = vpop.f32.mrf.mxu0
    %v706 = vadd.f32 %v692, %v705
    %v707 = vpop.f32.mrf.mxu0
    %v708 = vadd.f32 %v694, %v707
    %709 = vdwg.mxu0
    %v710 = vmax.f32 %v678, 0.0
    %v711 = vmax.f32 %v706, 0.0
    %v712 = vmax.f32 %v680, 0.0
    %v713 = vmax.f32 %v708, 0.0
    %v714 = vpack.c.bf16 %v712, %v710
    %v715 = vpack.c.bf16 %v713, %v711
    %v716 = vld [vmem:[#allocation7] sm:$0xf]
    %v717 = vld [vmem:[#allocation7 + $0x4] sm:$0xf]
    %v718 = vld [vmem:[#allocation7 + $0x8] sm:$0xf]
    %v719 = vld [vmem:[#allocation7 + $0xc] sm:$0xf]
    %v720 = vld [vmem:[#allocation7 + $0x10] sm:$0xf]
    %v721 = vld [vmem:[#allocation7 + $0x14] sm:$0xf]
    %v722 = vld [vmem:[#allocation7 + $0x18] sm:$0xf]
    %v723 = vld [vmem:[#allocation7 + $0x1c] sm:$0xf]
    %v724 = vld [vmem:[#allocation7 + $0x20] sm:$0xf]
    %v725 = vld [vmem:[#allocation7 + $0x24] sm:$0xf]
    %v726 = vld [vmem:[#allocation7 + $0x28] sm:$0xf]
    %v727 = vld [vmem:[#allocation7 + $0x2c] sm:$0xf]
    %v728 = vld [vmem:[#allocation7 + $0x30] sm:$0xf]
    %v729 = vld [vmem:[#allocation7 + $0x34] sm:$0xf]
    %v730 = vld [vmem:[#allocation7 + $0x38] sm:$0xf]
    %v731 = vld [vmem:[#allocation7 + $0x3c] sm:$0xf]
    %v732 = vld [vmem:[#allocation7 + $0x40] sm:$0xf]
    %v733 = vld [vmem:[#allocation7 + $0x44] sm:$0xf]
    %v734 = vld [vmem:[#allocation7 + $0x48] sm:$0xf]
    %v735 = vld [vmem:[#allocation7 + $0x4c] sm:$0xf]
    %v736 = vld [vmem:[#allocation7 + $0x50] sm:$0xf]
    %v737 = vld [vmem:[#allocation7 + $0x54] sm:$0xf]
    %v738 = vld [vmem:[#allocation7 + $0x58] sm:$0xf]
    %v739 = vld [vmem:[#allocation7 + $0x5c] sm:$0xf]
    %v740 = vld [vmem:[#allocation7 + $0x60] sm:$0xf]
    %v741 = vld [vmem:[#allocation7 + $0x64] sm:$0xf]
    %v742 = vld [vmem:[#allocation7 + $0x68] sm:$0xf]
    %v743 = vld [vmem:[#allocation7 + $0x6c] sm:$0xf]
    %v744 = vld [vmem:[#allocation7 + $0x70] sm:$0xf]
    %v745 = vld [vmem:[#allocation7 + $0x74] sm:$0xf]
    %v746 = vld [vmem:[#allocation7 + $0x78] sm:$0xf]
    %v747 = vld [vmem:[#allocation7 + $0x7c] sm:$0xf]
    %v748 = vld [vmem:[%s10] sm:$0x1]
    %v750 = vperm.slane %v748, 0
    %v784 = vunpack.c.l.b16 %v716
    %v785 = vunpack.c.l.b16 %v717
    %v786 = vunpack.c.l.b16 %v718
    %v787 = vunpack.c.l.b16 %v719
    %v788 = vunpack.c.l.b16 %v720
    %v789 = vunpack.c.l.b16 %v721
    %v790 = vunpack.c.l.b16 %v722
    %v791 = vunpack.c.l.b16 %v723
    %v792 = vunpack.c.l.b16 %v724
    %v793 = vunpack.c.l.b16 %v725
    %v794 = vunpack.c.l.b16 %v726
    %v795 = vunpack.c.l.b16 %v727
    %v796 = vunpack.c.l.b16 %v728
    %v797 = vunpack.c.l.b16 %v729
    %v798 = vunpack.c.l.b16 %v730
    %v799 = vunpack.c.l.b16 %v731
    %v800 = vunpack.c.l.b16 %v732
    %v801 = vunpack.c.l.b16 %v733
    %v802 = vunpack.c.l.b16 %v734
    %v803 = vunpack.c.l.b16 %v735
    %v804 = vunpack.c.l.b16 %v736
    %v805 = vunpack.c.l.b16 %v737
    %v806 = vunpack.c.l.b16 %v738
    %v807 = vunpack.c.l.b16 %v739
    %v808 = vunpack.c.l.b16 %v740
    %v809 = vunpack.c.l.b16 %v741
    %v810 = vunpack.c.l.b16 %v742
    %v811 = vunpack.c.l.b16 %v743
    %v812 = vunpack.c.l.b16 %v744
    %v813 = vunpack.c.l.b16 %v745
    %v814 = vunpack.c.l.b16 %v746
    %v815 = vunpack.c.l.b16 %v747
    %v816 = vpack.c.b16 %v785, %v784
    %v817 = vpack.c.b16 %v787, %v786
    %v818 = vpack.c.b16 %v789, %v788
    %v819 = vpack.c.b16 %v791, %v790
    %v820 = vpack.c.b16 %v793, %v792
    %v821 = vpack.c.b16 %v795, %v794
    %v822 = vpack.c.b16 %v797, %v796
    %v823 = vpack.c.b16 %v799, %v798
    %v824 = vpack.c.b16 %v801, %v800
    %v825 = vpack.c.b16 %v803, %v802
    %v826 = vpack.c.b16 %v805, %v804
    %v827 = vpack.c.b16 %v807, %v806
    %v828 = vpack.c.b16 %v809, %v808
    %v829 = vpack.c.b16 %v811, %v810
    %v830 = vpack.c.b16 %v813, %v812
    %v831 = vpack.c.b16 %v815, %v814
    %848 = vmatpush.bf16.msra.mxu0 %v823
    %849 = vmatpush.bf16.msra.mxu0 %v822
    %850 = vmatpush.bf16.msra.mxu0 %v821
    %851 = vmatpush.bf16.msra.mxu0 %v820
    %852 = vmatpush.bf16.msra.mxu0 %v819
    %853 = vmatpush.bf16.msra.mxu0 %v818
    %854 = vmatpush.bf16.msra.mxu0 %v817
    %855 = vmatpush.bf16.msra.mxu0 %v816
    %856 = vmatmul.bf16.gmra.mxu0 %v714
    %v857 = vpop.f32.mrf.mxu0
    %v858 = vadd.f32 %v750, %v857
    %v859 = vpop.f32.mrf.mxu0
    %v860 = vadd.f32 %v750, %v859
    %861 = vdwg.mxu0
    %862 = vmatpush.bf16.msra.mxu0 %v831
    %863 = vmatpush.bf16.msra.mxu0 %v830
    %864 = vmatpush.bf16.msra.mxu0 %v829
    %865 = vmatpush.bf16.msra.mxu0 %v828
    %866 = vmatpush.bf16.msra.mxu0 %v827
    %867 = vmatpush.bf16.msra.mxu0 %v826
    %868 = vmatpush.bf16.msra.mxu0 %v825
    %869 = vmatpush.bf16.msra.mxu0 %v824
    %870 = vmatmul.bf16.gmra.mxu0 %v715
    %v871 = vpop.f32.mrf.mxu0
    %v872 = vadd.f32 %v858, %v871
    %v873 = vpop.f32.mrf.mxu0
    %v874 = vadd.f32 %v860, %v873
    %875 = vdwg.mxu0
    %v876 = vpack.c.bf16 %v872, %v872
    %v877 = vpack.c.bf16 %v874, %v874
    %878 = vst [vmem:[#allocation8] sm:$0xf] %v876
    %879 = vst [vmem:[#allocation8 + $0x4] sm:$0xf] %v877
    // Predicated region
    $region58: #{tpu_custom_call.1} parent=1 // pred_check
      _
    $region59: #{tpu_custom_call.1} parent=1 // pred_check_branch
      %881 = sbr.rel (0) target = $region61
    $region60: #{tpu_custom_call.1} parent=1 // pred_region
      %883 = vsyncadd [#allocation4], 0
      %s884 = sshll.u32 [#allocation8], 4
      %s885 = int_to_ptr.vmem [resolvable:$true] %s884
      %s886 = sshll.u32 %s11, 4
      %s887 = int_to_ptr.hbm [resolvable:$true] %s886
      %892 = dma.vmem_to_hbm [thread:$0]  %s885, 128, %s887, [#allocation4], 64, 64, 4
    $region61: #{tpu_custom_call.1} parent=1 // pred_fallthru
      _
    // Predicated region
    $region62: #{tpu_custom_call.1} parent=1 // pred_check
      _
    $region63: #{tpu_custom_call.1} parent=1 // pred_check_branch
      %894 = sbr.rel (0) target = $region65
    $region64: #{tpu_custom_call.1} parent=1 // pred_region
      %896 = dma.done [#allocation4], 128
    $region65: #{tpu_custom_call.1} parent=1 // pred_fallthru
      _
    %897 = vsyncpa [#allocation3], 1
    %898 = vsyncpa [#allocation6], 1
    %899 = vsyncpa [#allocation4], 1

</llo_original>
